<compile_context>
chip_gen: v7x
topology: tpu7x:2x2x1
jax: 0.10.0
libtpu: 0.0.40
codegen_flags: <defaults>
</compile_context>

<pallas_src>
import jax
import jax.numpy as jnp
from jax.experimental import pallas as pl
from jax.experimental.pallas import tpu as pltpu

_SCALE = 1.78718727865
_SHIFT = 0.20662096414
_LANE = 128


def _sigmoid_f32(x):
    # Exact logistic via a single transcendental: sigmoid(x) = 0.5*tanh(0.5*x)+0.5.
    # One EUP op per element; mul/add stay on the VPU.
    return 0.5 * jnp.tanh(0.5 * x) + 0.5


def _normalized_swish_kernel(x_ref, o_ref):
    # Compute internally in f32 (no-op for f32 inputs; matches f32-internal
    # semantics for narrower input dtypes).
    x = x_ref[...].astype(jnp.float32)
    y = _SCALE * (x * _sigmoid_f32(x) - _SHIFT)
    o_ref[...] = y.astype(o_ref.dtype)


def _sublane_align(dtype) -> int:
    # f32 -> 8 rows/vreg, bf16 -> 16, int8/fp8 -> 32.
    return {4: 8, 2: 16, 1: 32}.get(jnp.dtype(dtype).itemsize, 8)


def _round_up(x: int, m: int) -> int:
    return ((x + m - 1) // m) * m


def _block_plan():
    """Generation-aware (target_block_bytes, vmem_limit_bytes)."""
    try:
        vmem = int(pltpu.get_tpu_info().vmem_capacity_bytes)
    except Exception:
        # Unknown generation: conservative plan that is safe everywhere.
        return 4 * 1024 * 1024, 32 * 1024 * 1024
    if vmem <= 64 * 1024 * 1024:
        # v7x-class: 64 MiB VMEM/TC but ~3.2 TB/s HBM -> larger blocks amortize
        # the ~0.35 us per-grid-step overhead. 8 MiB x 2 (in+out) x 2 (double
        # buffer) = 32 MiB, within the 48 MiB limit with headroom.
        return 8 * 1024 * 1024, 48 * 1024 * 1024
    # v5e/v6e-class: 128 MiB physical VMEM; 6 MiB blocks (24 MiB buffered) are
    # comfortably inside a 48 MiB scoped limit.
    return 6 * 1024 * 1024, 48 * 1024 * 1024


def normalized_swish(x: jax.Array, donate: bool = False) -> jax.Array:
    """Elementwise normalized swish, matching the PyTorch module."""
    orig_shape = x.shape
    dtype = x.dtype
    n = x.size

    # Ragged sizes: for a purely memory-bound elementwise op, padding would add
    # a full extra HBM read+write, so let XLA handle it (same math as the kernel
    # so the two paths are numerically consistent).
    if n == 0 or n % _LANE != 0:
        xf = x.astype(jnp.float32)
        return (_SCALE * (xf * _sigmoid_f32(xf) - _SHIFT)).astype(dtype)

    rows = n // _LANE
    slab = jnp.reshape(x, (rows, _LANE))  # layout-free reshape, no pad, no copy

    sub = _sublane_align(dtype)
    itemsize = jnp.dtype(dtype).itemsize
    block_bytes, vmem_limit = _block_plan()
    target_rows = max(sub, (block_bytes // (_LANE * itemsize)) // sub * sub)

    if rows <= 2 * sub:
        # Tiny input: one full-array block (block_shape == array shape is legal).
        block_rows = rows
        grid_n = 1
    else:
        # Pick the grid first: even and >= 4 whenever we split, so both v7x
        # TensorCores get balanced work and each keeps >=2 blocks in flight.
        num_blocks = max(4, _round_up(pl.cdiv(rows, target_rows), 2))
        block_rows = _round_up(pl.cdiv(rows, num_blocks), sub)
        grid_n = pl.cdiv(rows, block_rows)
        if grid_n > 1 and grid_n % 2 == 1:
            # Sublane rounding shrank the grid to an odd count; rebalance once.
            block_rows = _round_up(pl.cdiv(rows, grid_n + 1), sub)
            grid_n = pl.cdiv(rows, block_rows)

    out = pl.pallas_call(
        _normalized_swish_kernel,
        out_shape=jax.ShapeDtypeStruct((rows, _LANE), dtype),
        grid_spec=pltpu.PrefetchScalarGridSpec(
            num_scalar_prefetch=0,
            grid=(grid_n,),  # partial last block is masked by Pallas
            in_specs=[pl.BlockSpec((block_rows, _LANE), lambda i: (i, 0))],
            out_specs=pl.BlockSpec((block_rows, _LANE), lambda i: (i, 0)),
        ),
        compiler_params=pltpu.CompilerParams(
            dimension_semantics=("parallel",),
            vmem_limit_bytes=vmem_limit,
        ),
        input_output_aliases=({0: 0} if donate else {}),
    )(slab)

    return jnp.reshape(out, orig_shape)


def _reference(x):
    return _SCALE * (x * jax.nn.sigmoid(x) - _SHIFT)


if __name__ == "__main__":
    key = jax.random.PRNGKey(0)
    x = jax.random.normal(key, (2, 4, 16, 16), dtype=jnp.float32)  # NCHW

    y = normalized_swish(x)
    y = jax.block_until_ready(y)

    y_ref = _reference(x)
    assert y.shape == x.shape and y.dtype == x.dtype
    # Exact sigmoid now: only float-rounding differences vs the reference.
    assert jnp.allclose(y, y_ref, atol=1e-5, rtol=1e-5), (
        float(jnp.max(jnp.abs(y - y_ref)))
    )

    print("KERNEL_OK")
</pallas_src>

<mosaic_0001>
module attributes {stable_mosaic.version = 11 : i64} {
  func.func @_normalized_swish_kernel(%arg0: i32, %arg1: memref<16x128xf32, #tpu.memory_space<vmem>>, %arg2: memref<16x128xf32, #tpu.memory_space<vmem>>) attributes {dimension_semantics = [#tpu.dimension_semantics<parallel>], iteration_bounds = array<i64: 1>, scalar_prefetch = 0 : i64, scratch_operands = 0 : i64, tpu.core_type = #tpu.core_type<tc>, window_params = [{transform_indices = @transform_0, window_bounds = array<i64: 16, 128>}, {transform_indices = @transform_1, window_bounds = array<i64: 16, 128>}]} {
    %c0 = arith.constant 0 : index
    %c0_0 = arith.constant 0 : index
    %0 = vector.load %arg1[%c0, %c0_0] : memref<16x128xf32, #tpu.memory_space<vmem>>, vector<16x128xf32>
    %cst = arith.constant 5.000000e-01 : f32
    %1 = vector.broadcast %cst : f32 to vector<16x128xf32>
    %2 = arith.mulf %1, %0 : vector<16x128xf32>
    %3 = math.tanh %2 : vector<16x128xf32>
    %cst_1 = arith.constant 5.000000e-01 : f32
    %4 = vector.broadcast %cst_1 : f32 to vector<16x128xf32>
    %5 = arith.mulf %4, %3 : vector<16x128xf32>
    %cst_2 = arith.constant 5.000000e-01 : f32
    %6 = vector.broadcast %cst_2 : f32 to vector<16x128xf32>
    %7 = arith.addf %5, %6 : vector<16x128xf32>
    %8 = arith.mulf %0, %7 : vector<16x128xf32>
    %cst_3 = arith.constant 0.206620961 : f32
    %9 = vector.broadcast %cst_3 : f32 to vector<16x128xf32>
    %10 = arith.subf %8, %9 : vector<16x128xf32>
    %cst_4 = arith.constant 1.78718734 : f32
    %11 = vector.broadcast %cst_4 : f32 to vector<16x128xf32>
    %12 = arith.mulf %11, %10 : vector<16x128xf32>
    %c0_5 = arith.constant 0 : index
    %c0_6 = arith.constant 0 : index
    %13 = vector.load %arg2[%c0_5, %c0_6] : memref<16x128xf32, #tpu.memory_space<vmem>>, vector<16x128xf32>
    tpu.vector_store %arg2[%c0_5, %c0_6], %12 {strides = array<i32>} : memref<16x128xf32, #tpu.memory_space<vmem>>, vector<16x128xf32>,
    return
  }
  func.func @transform_0(%arg0: i32) -> (i32, i32) {
    %c0_i32 = arith.constant 0 : i32
    %c0_i32_0 = arith.constant 0 : i32
    return %arg0, %c0_i32 : i32, i32
  }
  func.func @transform_1(%arg0: i32) -> (i32, i32) {
    %c0_i32 = arith.constant 0 : i32
    %c0_i32_0 = arith.constant 0 : i32
    return %arg0, %c0_i32 : i32, i32
  }
}

</mosaic_0001>

<llo_original>
// kernel: tpu_custom_call.1
$region0: #{tpu_custom_call.1}
  #allocation0 [shape = 'u32[]', space=smem, size = 0x4, offset = 0x4, fixed_abs, tag = 'smem constant byte address 0x4 - core index']
  #allocation1 [shape = 'u32[144,128]{1,0:T(1,128)}', space=vmem, size = 0x12000, scoped, tag = 'internal scratch']
  %s0 = inlined_call_operand.hbm [shape: f32[16,128], index: 0, kind: input, shape index: {}]
  %s1 = inlined_call_operand.hbm [shape: f32[16,128], index: 1, kind: output, shape index: {}]
  %s2 = sld [smem:[#allocation0]]
  $region18: #{tpu_custom_call.1} parent=0
    _
  %s4 = ssub.s32 1, %s2
  %s5 = scalar_select 0, %s4, %s2
  $region1: #{tpu_custom_call.1} parent=0
    #allocation2 [shape = 'u8[8192]{0}', space=vmem, size = 0x2000, scoped, tag = 'input window, operand 0, single buffered']
    #allocation3 [shape = 's32[1]{0}', space=sflag, size = 0x4, scoped, tag = 'scoped memory for tpu_custom_call.1']
    #allocation4 [shape = 's32[1]{0}', space=sflag, size = 0x4, scoped, tag = 'scoped memory for tpu_custom_call.1']
    #allocation5 [shape = 'u8[8192]{0}', space=vmem, size = 0x2000, scoped, tag = 'output window, operand 0, single buffered']
    %6 = vsyncpa [#allocation3], 0
    %7 = vsyncpa [#allocation4], 0
    // Predicated region
    $region2: #{tpu_custom_call.1} parent=1 // pred_check
      _
    $region3: #{tpu_custom_call.1} parent=1 // pred_check_branch
      %9 = sbr.rel (0) target = $region5
    $region4: #{tpu_custom_call.1} parent=1 // pred_region
      %s11 = ssub.s32 256, 256
      %12 = vsyncadd [#allocation3], %s11
      %s13 = sshll.u32 [#allocation2], 4
      %s14 = int_to_ptr.vmem [resolvable:$true] %s13
      %19 = dma.hbm_to_vmem [thread:$0]  %s0, 256, %s14, [#allocation3], 128, 128, 8
    $region5: #{tpu_custom_call.1} parent=1 // pred_fallthru
      _
    // Predicated region
    $region6: #{tpu_custom_call.1} parent=1 // pred_check
      _
    $region7: #{tpu_custom_call.1} parent=1 // pred_check_branch
      %21 = sbr.rel (0) target = $region9
    $region8: #{tpu_custom_call.1} parent=1 // pred_region
      %22 = dma.done [#allocation3], 256
    $region9: #{tpu_custom_call.1} parent=1 // pred_fallthru
      _
    %v23 = vld [vmem:[#allocation2] sm:$0xff]
    %v24 = vld [vmem:[#allocation2 + $0x8] sm:$0xff]
    %v25 = vmul.f32 %v23, 0.5
    %v26 = vmul.f32 %v24, 0.5
    %v27 = vtanh.pop %v25
    %v28 = vtanh.pop %v26
    %v29 = vmul.f32 %v27, 0.5
    %v30 = vmul.f32 %v28, 0.5
    %v31 = vadd.f32 %v29, 0.5
    %v32 = vadd.f32 %v30, 0.5
    %v33 = vmul.f32 %v23, %v31
    %v34 = vmul.f32 %v24, %v32
    %v35 = vsub.f32 %v33, 0.20662096
    %v36 = vsub.f32 %v34, 0.20662096
    %v37 = vmul.f32 %v35, 1.7871873
    %v38 = vmul.f32 %v36, 1.7871873
    %39 = vst [vmem:[#allocation5] sm:$0xff] %v37
    %40 = vst [vmem:[#allocation5 + $0x8] sm:$0xff] %v38
    // Predicated region
    $region10: #{tpu_custom_call.1} parent=1 // pred_check
      _
    $region11: #{tpu_custom_call.1} parent=1 // pred_check_branch
      %42 = sbr.rel (0) target = $region13
    $region12: #{tpu_custom_call.1} parent=1 // pred_region
      %s44 = ssub.s32 256, 256
      %45 = vsyncadd [#allocation4], %s44
      %s46 = sshll.u32 [#allocation5], 4
      %s47 = int_to_ptr.vmem [resolvable:$true] %s46
      %52 = dma.vmem_to_hbm [thread:$0]  %s47, 256, %s1, [#allocation4], 128, 128, 8
    $region13: #{tpu_custom_call.1} parent=1 // pred_fallthru
      _
    // Predicated region
    $region14: #{tpu_custom_call.1} parent=1 // pred_check
      _
    $region15: #{tpu_custom_call.1} parent=1 // pred_check_branch
      %54 = sbr.rel (0) target = $region17
    $region16: #{tpu_custom_call.1} parent=1 // pred_region
      %55 = dma.done [#allocation4], 256
    $region17: #{tpu_custom_call.1} parent=1 // pred_fallthru
      _
    %56 = vsyncpa [#allocation3], 1
    %57 = vsyncpa [#allocation4], 1

</llo_original>
